<compile_context>
chip_gen: v6e
topology: v6e:2x2x1
jax: 0.10.0
libtpu: 0.0.40
codegen_flags: <defaults>
</compile_context>

<pallas_src>
import functools

import jax
import jax.numpy as jnp
from jax import lax
from jax.experimental import pallas as pl
from jax.experimental.pallas import tpu as pltpu


def _elu(x):
    # ELU(alpha=1). exp argument clamped at 0 so the untaken branch of the
    # select never overflows to inf.
    # TODO(synk): jnp.expm1 would be marginally more precise near x~0.
    return jnp.where(x > 0, x, jnp.exp(jnp.minimum(x, 0.0)) - 1.0)


def _fused_conv_gat_kernel(xpad_ref, w_ref, b_ref, a1_ref, a2_ref, adj_ref,
                           bias_ref, out_ref, *, C, k, Ho, Wo):
    # ---------- Conv2d (out_channels==1, stride==1) as shifted-slice MACs ----
    # xpad_ref: (C, Ho+k-1, Wo+k-1) VMEM; w_ref: (C*k*k,) SMEM; b_ref: (1,) SMEM
    acc = jnp.full((Ho, Wo), b_ref[0], dtype=jnp.float32)
    idx = 0
    for c in range(C):
        plane = xpad_ref[c]                        # load channel plane once
        for di in range(k):
            for dj in range(k):
                w = w_ref[idx]                     # scalar read (sreg)
                idx += 1
                acc = acc + w * lax.slice(plane, (di, dj), (di + Ho, dj + Wo))
    h = acc                                        # (N, D) = (Ho, Wo)

    # ---------- GAT-style attention ------------------------------------------
    a1 = a1_ref[...]                               # (1, D)
    a2 = a2_ref[...]                               # (1, D)
    # Wh1: per-row reduction (XLU), naturally column-shaped (N, 1).
    wh1 = jnp.sum(h * a1, axis=1, keepdims=True)                      # (N, 1)
    # Wh2 produced directly as a lane-major row (1, N): contract over D.
    wh2_row = lax.dot_general(a2, h, (((1,), (1,)), ((), ())),
                              preferred_element_type=jnp.float32)     # (1, N)
    e = _elu(wh1 + wh2_row)                                           # (N, N)

    att = jnp.where(adj_ref[...] > 0, e, -9.0e15)
    att = att - jnp.max(att, axis=1, keepdims=True)
    p = jnp.exp(att)
    denom = jnp.sum(p, axis=1, keepdims=True)                         # (N, 1)
    inv = pl.reciprocal(denom, approx=True)        # EUP slot
    inv = inv * (2.0 - denom * inv)                # one NR step -> f32 accurate
    att = p * inv                                  # row softmax
    # TODO(synk): F.dropout(attention, training=self.training) skipped
    # (inference semantics: training=False -> identity).

    h_pass = jnp.dot(att, h, preferred_element_type=jnp.float32)      # (N, D)
    h_pass = _elu(h_pass)

    # F.normalize(p=2, dim=1): x / max(||x||, 1e-12) == x * rsqrt(max(ss, 1e-24))
    ss = jnp.maximum(jnp.sum(h_pass * h_pass, axis=1, keepdims=True), 1e-24)
    r = lax.rsqrt(ss)
    r = r * (1.5 - 0.5 * ss * r * r)               # one NR step -> f32 accurate
    out_ref[...] = h_pass * r + bias_ref[...]                         # (1,D) bias


def conv_module_forward(x, adj, params, *, stride=1, padding=0):
    conv_w = params["conv_w"]          # (1, C, k, k)
    conv_b = params["conv_b"]          # (1,)
    a = params["a"]                    # (2*hidden, 1)
    bias = params["bias"]              # (hidden,)

    B, C, H, W = x.shape
    assert B == 1 and conv_w.shape[0] == 1, \
        "module's reshape(h.shape[2], h.shape[3]) needs batch==1, out_channels==1"
    # TODO(synk): stride > 1 not implemented in the fused Pallas conv path.
    assert stride == 1

    k = conv_w.shape[2]
    Ho = (H + 2 * padding - k) // stride + 1
    Wo = (W + 2 * padding - k) // stride + 1
    D = Wo

    xpad = jnp.pad(x[0].astype(jnp.float32),
                   ((0, 0), (padding, padding), (padding, padding)))
    w_flat = conv_w.reshape(-1).astype(jnp.float32)     # (C*k*k,) in (c,kh,kw)
    b_s = conv_b.reshape(1).astype(jnp.float32)
    a1 = a[:D, 0].reshape(1, D).astype(jnp.float32)
    a2 = a[D:, 0].reshape(1, D).astype(jnp.float32)
    bias_row = bias.reshape(1, D).astype(jnp.float32)

    kernel = functools.partial(_fused_conv_gat_kernel, C=C, k=k, Ho=Ho, Wo=Wo)
    vmem = pl.BlockSpec(memory_space=pltpu.MemorySpace.VMEM)
    smem = pl.BlockSpec(memory_space=pltpu.MemorySpace.SMEM)
    return pl.pallas_call(
        kernel,
        out_shape=jax.ShapeDtypeStruct((Ho, Wo), jnp.float32),
        in_specs=[vmem, smem, smem, vmem, vmem, vmem, vmem],
        out_specs=vmem,
    )(xpad, w_flat, b_s, a1, a2, adj.astype(jnp.float32), bias_row)


# pure-JAX reference (high-precision) for a sanity check
def _reference_forward(x, adj, params, *, stride, padding):
    h = lax.conv_general_dilated(
        x, params["conv_w"], (stride, stride),
        [(padding, padding), (padding, padding)],
        dimension_numbers=("NCHW", "OIHW", "NCHW"),
        precision=lax.Precision.HIGHEST,
    ) + params["conv_b"].reshape(1, -1, 1, 1)
    h = h.reshape(h.shape[2], h.shape[3])
    D = h.shape[1]
    wh1 = jnp.dot(h, params["a"][:D, :], precision=lax.Precision.HIGHEST)
    wh2 = jnp.dot(h, params["a"][D:, :], precision=lax.Precision.HIGHEST)
    e = jax.nn.elu(wh1 + wh2.T)
    att = jnp.where(adj > 0, e, -9.0e15)
    att = jax.nn.softmax(att, axis=1)
    hp = jax.nn.elu(jnp.dot(att, h, precision=lax.Precision.HIGHEST))
    hp = hp / jnp.maximum(jnp.linalg.norm(hp, axis=1, keepdims=True), 1e-12)
    return hp + params["bias"][None, :]


if __name__ == "__main__":
    in_channels, out_channels = 4, 1          # out_channels must be 1 (reshape)
    kernel_size, stride, padding = 3, 1, 1
    H, W = 16, 32
    hidden_dim = W                            # conv output width == hidden_dim
    nodes = (H + 2 * padding - kernel_size) // stride + 1

    key = jax.random.PRNGKey(0)
    k_w, k_b, k_a, k_x, k_adj = jax.random.split(key, 5)

    fan_in = in_channels * kernel_size * kernel_size
    wb = 1.0 / (fan_in ** 0.5)
    conv_w = jax.random.uniform(
        k_w, (out_channels, in_channels, kernel_size, kernel_size),
        jnp.float32, -wb, wb)
    conv_b = jax.random.uniform(k_b, (out_channels,), jnp.float32, -wb, wb)
    a_bound = 1.414 * (6.0 / (2 * hidden_dim + 1)) ** 0.5  # xavier_uniform gain=1.414
    a_param = jax.random.uniform(k_a, (2 * hidden_dim, 1), jnp.float32,
                                 -a_bound, a_bound)
    bias = jnp.zeros((hidden_dim,), jnp.float32)           # module: bias.fill_(0)

    params = {"conv_w": conv_w, "conv_b": conv_b, "a": a_param, "bias": bias}

    x = jax.random.normal(k_x, (1, in_channels, H, W), jnp.float32)
    adj = (jax.random.uniform(k_adj, (nodes, nodes)) > 0.5).astype(jnp.float32)
    adj = jnp.maximum(adj, jnp.eye(nodes, dtype=jnp.float32))  # self-loops

    out = conv_module_forward(x, adj, params, stride=stride, padding=padding)
    out = jax.block_until_ready(out)

    ref = _reference_forward(x, adj, params, stride=stride, padding=padding)
    assert out.shape == (nodes, hidden_dim)
    assert jnp.allclose(out, ref, atol=1e-4, rtol=1e-4), float(
        jnp.max(jnp.abs(out - ref)))

    print("KERNEL_OK")
</pallas_src>

<mosaic_0001>
module attributes {stable_mosaic.version = 11 : i64} {
  func.func @_fused_conv_gat_kernel(%arg0: memref<4x18x34xf32, #tpu.memory_space<vmem>>, %arg1: memref<36xf32, #tpu.memory_space<smem>>, %arg2: memref<1xf32, #tpu.memory_space<smem>>, %arg3: memref<1x32xf32, #tpu.memory_space<vmem>>, %arg4: memref<1x32xf32, #tpu.memory_space<vmem>>, %arg5: memref<16x16xf32, #tpu.memory_space<vmem>>, %arg6: memref<1x32xf32, #tpu.memory_space<vmem>>, %arg7: memref<16x32xf32, #tpu.memory_space<vmem>>) attributes {dimension_semantics = [], scalar_prefetch = 0 : i64, scratch_operands = 0 : i64, tpu.core_type = #tpu.core_type<tc>} {
    %c0 = arith.constant 0 : index
    %0 = memref.load %arg2[%c0] : memref<1xf32, #tpu.memory_space<smem>>
    %1 = vector.broadcast %0 : f32 to vector<16x32xf32>
    %c0_0 = arith.constant 0 : index
    %c0_1 = arith.constant 0 : index
    %c0_2 = arith.constant 0 : index
    %2 = vector.load %arg0[%c0_0, %c0_1, %c0_2] : memref<4x18x34xf32, #tpu.memory_space<vmem>>, vector<1x18x34xf32>
    %3 = vector.shape_cast %2 : vector<1x18x34xf32> to vector<18x34xf32>
    %c0_3 = arith.constant 0 : index
    %4 = memref.load %arg1[%c0_3] : memref<36xf32, #tpu.memory_space<smem>>
    %5 = vector.extract_strided_slice %3 {offsets = [0, 0], sizes = [16, 32], strides = [1, 1]} : vector<18x34xf32> to vector<16x32xf32>
    %6 = vector.broadcast %4 : f32 to vector<16x32xf32>
    %7 = arith.mulf %6, %5 : vector<16x32xf32>
    %8 = arith.addf %1, %7 : vector<16x32xf32>
    %c1 = arith.constant 1 : index
    %9 = memref.load %arg1[%c1] : memref<36xf32, #tpu.memory_space<smem>>
    %10 = vector.extract_strided_slice %3 {offsets = [0, 1], sizes = [16, 32], strides = [1, 1]} : vector<18x34xf32> to vector<16x32xf32>
    %11 = vector.broadcast %9 : f32 to vector<16x32xf32>
    %12 = arith.mulf %11, %10 : vector<16x32xf32>
    %13 = arith.addf %8, %12 : vector<16x32xf32>
    %c2 = arith.constant 2 : index
    %14 = memref.load %arg1[%c2] : memref<36xf32, #tpu.memory_space<smem>>
    %15 = vector.extract_strided_slice %3 {offsets = [0, 2], sizes = [16, 32], strides = [1, 1]} : vector<18x34xf32> to vector<16x32xf32>
    %16 = vector.broadcast %14 : f32 to vector<16x32xf32>
    %17 = arith.mulf %16, %15 : vector<16x32xf32>
    %18 = arith.addf %13, %17 : vector<16x32xf32>
    %c3 = arith.constant 3 : index
    %19 = memref.load %arg1[%c3] : memref<36xf32, #tpu.memory_space<smem>>
    %20 = vector.extract_strided_slice %3 {offsets = [1, 0], sizes = [16, 32], strides = [1, 1]} : vector<18x34xf32> to vector<16x32xf32>
    %21 = vector.broadcast %19 : f32 to vector<16x32xf32>
    %22 = arith.mulf %21, %20 : vector<16x32xf32>
    %23 = arith.addf %18, %22 : vector<16x32xf32>
    %c4 = arith.constant 4 : index
    %24 = memref.load %arg1[%c4] : memref<36xf32, #tpu.memory_space<smem>>
    %25 = vector.extract_strided_slice %3 {offsets = [1, 1], sizes = [16, 32], strides = [1, 1]} : vector<18x34xf32> to vector<16x32xf32>
    %26 = vector.broadcast %24 : f32 to vector<16x32xf32>
    %27 = arith.mulf %26, %25 : vector<16x32xf32>
    %28 = arith.addf %23, %27 : vector<16x32xf32>
    %c5 = arith.constant 5 : index
    %29 = memref.load %arg1[%c5] : memref<36xf32, #tpu.memory_space<smem>>
    %30 = vector.extract_strided_slice %3 {offsets = [1, 2], sizes = [16, 32], strides = [1, 1]} : vector<18x34xf32> to vector<16x32xf32>
    %31 = vector.broadcast %29 : f32 to vector<16x32xf32>
    %32 = arith.mulf %31, %30 : vector<16x32xf32>
    %33 = arith.addf %28, %32 : vector<16x32xf32>
    %c6 = arith.constant 6 : index
    %34 = memref.load %arg1[%c6] : memref<36xf32, #tpu.memory_space<smem>>
    %35 = vector.extract_strided_slice %3 {offsets = [2, 0], sizes = [16, 32], strides = [1, 1]} : vector<18x34xf32> to vector<16x32xf32>
    %36 = vector.broadcast %34 : f32 to vector<16x32xf32>
    %37 = arith.mulf %36, %35 : vector<16x32xf32>
    %38 = arith.addf %33, %37 : vector<16x32xf32>
    %c7 = arith.constant 7 : index
    %39 = memref.load %arg1[%c7] : memref<36xf32, #tpu.memory_space<smem>>
    %40 = vector.extract_strided_slice %3 {offsets = [2, 1], sizes = [16, 32], strides = [1, 1]} : vector<18x34xf32> to vector<16x32xf32>
    %41 = vector.broadcast %39 : f32 to vector<16x32xf32>
    %42 = arith.mulf %41, %40 : vector<16x32xf32>
    %43 = arith.addf %38, %42 : vector<16x32xf32>
    %c8 = arith.constant 8 : index
    %44 = memref.load %arg1[%c8] : memref<36xf32, #tpu.memory_space<smem>>
    %45 = vector.extract_strided_slice %3 {offsets = [2, 2], sizes = [16, 32], strides = [1, 1]} : vector<18x34xf32> to vector<16x32xf32>
    %46 = vector.broadcast %44 : f32 to vector<16x32xf32>
    %47 = arith.mulf %46, %45 : vector<16x32xf32>
    %48 = arith.addf %43, %47 : vector<16x32xf32>
    %c1_4 = arith.constant 1 : index
    %c0_5 = arith.constant 0 : index
    %c0_6 = arith.constant 0 : index
    %49 = vector.load %arg0[%c1_4, %c0_5, %c0_6] : memref<4x18x34xf32, #tpu.memory_space<vmem>>, vector<1x18x34xf32>
    %50 = vector.shape_cast %49 : vector<1x18x34xf32> to vector<18x34xf32>
    %c9 = arith.constant 9 : index
    %51 = memref.load %arg1[%c9] : memref<36xf32, #tpu.memory_space<smem>>
    %52 = vector.extract_strided_slice %50 {offsets = [0, 0], sizes = [16, 32], strides = [1, 1]} : vector<18x34xf32> to vector<16x32xf32>
    %53 = vector.broadcast %51 : f32 to vector<16x32xf32>
    %54 = arith.mulf %53, %52 : vector<16x32xf32>
    %55 = arith.addf %48, %54 : vector<16x32xf32>
    %c10 = arith.constant 10 : index
    %56 = memref.load %arg1[%c10] : memref<36xf32, #tpu.memory_space<smem>>
    %57 = vector.extract_strided_slice %50 {offsets = [0, 1], sizes = [16, 32], strides = [1, 1]} : vector<18x34xf32> to vector<16x32xf32>
    %58 = vector.broadcast %56 : f32 to vector<16x32xf32>
    %59 = arith.mulf %58, %57 : vector<16x32xf32>
    %60 = arith.addf %55, %59 : vector<16x32xf32>
    %c11 = arith.constant 11 : index
    %61 = memref.load %arg1[%c11] : memref<36xf32, #tpu.memory_space<smem>>
    %62 = vector.extract_strided_slice %50 {offsets = [0, 2], sizes = [16, 32], strides = [1, 1]} : vector<18x34xf32> to vector<16x32xf32>
    %63 = vector.broadcast %61 : f32 to vector<16x32xf32>
    %64 = arith.mulf %63, %62 : vector<16x32xf32>
    %65 = arith.addf %60, %64 : vector<16x32xf32>
    %c12 = arith.constant 12 : index
    %66 = memref.load %arg1[%c12] : memref<36xf32, #tpu.memory_space<smem>>
    %67 = vector.extract_strided_slice %50 {offsets = [1, 0], sizes = [16, 32], strides = [1, 1]} : vector<18x34xf32> to vector<16x32xf32>
    %68 = vector.broadcast %66 : f32 to vector<16x32xf32>
    %69 = arith.mulf %68, %67 : vector<16x32xf32>
    %70 = arith.addf %65, %69 : vector<16x32xf32>
    %c13 = arith.constant 13 : index
    %71 = memref.load %arg1[%c13] : memref<36xf32, #tpu.memory_space<smem>>
    %72 = vector.extract_strided_slice %50 {offsets = [1, 1], sizes = [16, 32], strides = [1, 1]} : vector<18x34xf32> to vector<16x32xf32>
    %73 = vector.broadcast %71 : f32 to vector<16x32xf32>
    %74 = arith.mulf %73, %72 : vector<16x32xf32>
    %75 = arith.addf %70, %74 : vector<16x32xf32>
    %c14 = arith.constant 14 : index
    %76 = memref.load %arg1[%c14] : memref<36xf32, #tpu.memory_space<smem>>
    %77 = vector.extract_strided_slice %50 {offsets = [1, 2], sizes = [16, 32], strides = [1, 1]} : vector<18x34xf32> to vector<16x32xf32>
    %78 = vector.broadcast %76 : f32 to vector<16x32xf32>
    %79 = arith.mulf %78, %77 : vector<16x32xf32>
    %80 = arith.addf %75, %79 : vector<16x32xf32>
    %c15 = arith.constant 15 : index
    %81 = memref.load %arg1[%c15] : memref<36xf32, #tpu.memory_space<smem>>
    %82 = vector.extract_strided_slice %50 {offsets = [2, 0], sizes = [16, 32], strides = [1, 1]} : vector<18x34xf32> to vector<16x32xf32>
    %83 = vector.broadcast %81 : f32 to vector<16x32xf32>
    %84 = arith.mulf %83, %82 : vector<16x32xf32>
    %85 = arith.addf %80, %84 : vector<16x32xf32>
    %c16 = arith.constant 16 : index
    %86 = memref.load %arg1[%c16] : memref<36xf32, #tpu.memory_space<smem>>
    %87 = vector.extract_strided_slice %50 {offsets = [2, 1], sizes = [16, 32], strides = [1, 1]} : vector<18x34xf32> to vector<16x32xf32>
    %88 = vector.broadcast %86 : f32 to vector<16x32xf32>
    %89 = arith.mulf %88, %87 : vector<16x32xf32>
    %90 = arith.addf %85, %89 : vector<16x32xf32>
    %c17 = arith.constant 17 : index
    %91 = memref.load %arg1[%c17] : memref<36xf32, #tpu.memory_space<smem>>
    %92 = vector.extract_strided_slice %50 {offsets = [2, 2], sizes = [16, 32], strides = [1, 1]} : vector<18x34xf32> to vector<16x32xf32>
    %93 = vector.broadcast %91 : f32 to vector<16x32xf32>
    %94 = arith.mulf %93, %92 : vector<16x32xf32>
    %95 = arith.addf %90, %94 : vector<16x32xf32>
    %c2_7 = arith.constant 2 : index
    %c0_8 = arith.constant 0 : index
    %c0_9 = arith.constant 0 : index
    %96 = vector.load %arg0[%c2_7, %c0_8, %c0_9] : memref<4x18x34xf32, #tpu.memory_space<vmem>>, vector<1x18x34xf32>
    %97 = vector.shape_cast %96 : vector<1x18x34xf32> to vector<18x34xf32>
    %c18 = arith.constant 18 : index
    %98 = memref.load %arg1[%c18] : memref<36xf32, #tpu.memory_space<smem>>
    %99 = vector.extract_strided_slice %97 {offsets = [0, 0], sizes = [16, 32], strides = [1, 1]} : vector<18x34xf32> to vector<16x32xf32>
    %100 = vector.broadcast %98 : f32 to vector<16x32xf32>
    %101 = arith.mulf %100, %99 : vector<16x32xf32>
    %102 = arith.addf %95, %101 : vector<16x32xf32>
    %c19 = arith.constant 19 : index
    %103 = memref.load %arg1[%c19] : memref<36xf32, #tpu.memory_space<smem>>
    %104 = vector.extract_strided_slice %97 {offsets = [0, 1], sizes = [16, 32], strides = [1, 1]} : vector<18x34xf32> to vector<16x32xf32>
    %105 = vector.broadcast %103 : f32 to vector<16x32xf32>
    %106 = arith.mulf %105, %104 : vector<16x32xf32>
    %107 = arith.addf %102, %106 : vector<16x32xf32>
    %c20 = arith.constant 20 : index
    %108 = memref.load %arg1[%c20] : memref<36xf32, #tpu.memory_space<smem>>
    %109 = vector.extract_strided_slice %97 {offsets = [0, 2], sizes = [16, 32], strides = [1, 1]} : vector<18x34xf32> to vector<16x32xf32>
    %110 = vector.broadcast %108 : f32 to vector<16x32xf32>
    %111 = arith.mulf %110, %109 : vector<16x32xf32>
    %112 = arith.addf %107, %111 : vector<16x32xf32>
    %c21 = arith.constant 21 : index
    %113 = memref.load %arg1[%c21] : memref<36xf32, #tpu.memory_space<smem>>
    %114 = vector.extract_strided_slice %97 {offsets = [1, 0], sizes = [16, 32], strides = [1, 1]} : vector<18x34xf32> to vector<16x32xf32>
    %115 = vector.broadcast %113 : f32 to vector<16x32xf32>
    %116 = arith.mulf %115, %114 : vector<16x32xf32>
    %117 = arith.addf %112, %116 : vector<16x32xf32>
    %c22 = arith.constant 22 : index
    %118 = memref.load %arg1[%c22] : memref<36xf32, #tpu.memory_space<smem>>
    %119 = vector.extract_strided_slice %97 {offsets = [1, 1], sizes = [16, 32], strides = [1, 1]} : vector<18x34xf32> to vector<16x32xf32>
    %120 = vector.broadcast %118 : f32 to vector<16x32xf32>
    %121 = arith.mulf %120, %119 : vector<16x32xf32>
    %122 = arith.addf %117, %121 : vector<16x32xf32>
    %c23 = arith.constant 23 : index
    %123 = memref.load %arg1[%c23] : memref<36xf32, #tpu.memory_space<smem>>
    %124 = vector.extract_strided_slice %97 {offsets = [1, 2], sizes = [16, 32], strides = [1, 1]} : vector<18x34xf32> to vector<16x32xf32>
    %125 = vector.broadcast %123 : f32 to vector<16x32xf32>
    %126 = arith.mulf %125, %124 : vector<16x32xf32>
    %127 = arith.addf %122, %126 : vector<16x32xf32>
    %c24 = arith.constant 24 : index
    %128 = memref.load %arg1[%c24] : memref<36xf32, #tpu.memory_space<smem>>
    %129 = vector.extract_strided_slice %97 {offsets = [2, 0], sizes = [16, 32], strides = [1, 1]} : vector<18x34xf32> to vector<16x32xf32>
    %130 = vector.broadcast %128 : f32 to vector<16x32xf32>
    %131 = arith.mulf %130, %129 : vector<16x32xf32>
    %132 = arith.addf %127, %131 : vector<16x32xf32>
    %c25 = arith.constant 25 : index
    %133 = memref.load %arg1[%c25] : memref<36xf32, #tpu.memory_space<smem>>
    %134 = vector.extract_strided_slice %97 {offsets = [2, 1], sizes = [16, 32], strides = [1, 1]} : vector<18x34xf32> to vector<16x32xf32>
    %135 = vector.broadcast %133 : f32 to vector<16x32xf32>
    %136 = arith.mulf %135, %134 : vector<16x32xf32>
    %137 = arith.addf %132, %136 : vector<16x32xf32>
    %c26 = arith.constant 26 : index
    %138 = memref.load %arg1[%c26] : memref<36xf32, #tpu.memory_space<smem>>
    %139 = vector.extract_strided_slice %97 {offsets = [2, 2], sizes = [16, 32], strides = [1, 1]} : vector<18x34xf32> to vector<16x32xf32>
    %140 = vector.broadcast %138 : f32 to vector<16x32xf32>
    %141 = arith.mulf %140, %139 : vector<16x32xf32>
    %142 = arith.addf %137, %141 : vector<16x32xf32>
    %c3_10 = arith.constant 3 : index
    %c0_11 = arith.constant 0 : index
    %c0_12 = arith.constant 0 : index
    %143 = vector.load %arg0[%c3_10, %c0_11, %c0_12] : memref<4x18x34xf32, #tpu.memory_space<vmem>>, vector<1x18x34xf32>
    %144 = vector.shape_cast %143 : vector<1x18x34xf32> to vector<18x34xf32>
    %c27 = arith.constant 27 : index
    %145 = memref.load %arg1[%c27] : memref<36xf32, #tpu.memory_space<smem>>
    %146 = vector.extract_strided_slice %144 {offsets = [0, 0], sizes = [16, 32], strides = [1, 1]} : vector<18x34xf32> to vector<16x32xf32>
    %147 = vector.broadcast %145 : f32 to vector<16x32xf32>
    %148 = arith.mulf %147, %146 : vector<16x32xf32>
    %149 = arith.addf %142, %148 : vector<16x32xf32>
    %c28 = arith.constant 28 : index
    %150 = memref.load %arg1[%c28] : memref<36xf32, #tpu.memory_space<smem>>
    %151 = vector.extract_strided_slice %144 {offsets = [0, 1], sizes = [16, 32], strides = [1, 1]} : vector<18x34xf32> to vector<16x32xf32>
    %152 = vector.broadcast %150 : f32 to vector<16x32xf32>
    %153 = arith.mulf %152, %151 : vector<16x32xf32>
    %154 = arith.addf %149, %153 : vector<16x32xf32>
    %c29 = arith.constant 29 : index
    %155 = memref.load %arg1[%c29] : memref<36xf32, #tpu.memory_space<smem>>
    %156 = vector.extract_strided_slice %144 {offsets = [0, 2], sizes = [16, 32], strides = [1, 1]} : vector<18x34xf32> to vector<16x32xf32>
    %157 = vector.broadcast %155 : f32 to vector<16x32xf32>
    %158 = arith.mulf %157, %156 : vector<16x32xf32>
    %159 = arith.addf %154, %158 : vector<16x32xf32>
    %c30 = arith.constant 30 : index
    %160 = memref.load %arg1[%c30] : memref<36xf32, #tpu.memory_space<smem>>
    %161 = vector.extract_strided_slice %144 {offsets = [1, 0], sizes = [16, 32], strides = [1, 1]} : vector<18x34xf32> to vector<16x32xf32>
    %162 = vector.broadcast %160 : f32 to vector<16x32xf32>
    %163 = arith.mulf %162, %161 : vector<16x32xf32>
    %164 = arith.addf %159, %163 : vector<16x32xf32>
    %c31 = arith.constant 31 : index
    %165 = memref.load %arg1[%c31] : memref<36xf32, #tpu.memory_space<smem>>
    %166 = vector.extract_strided_slice %144 {offsets = [1, 1], sizes = [16, 32], strides = [1, 1]} : vector<18x34xf32> to vector<16x32xf32>
    %167 = vector.broadcast %165 : f32 to vector<16x32xf32>
    %168 = arith.mulf %167, %166 : vector<16x32xf32>
    %169 = arith.addf %164, %168 : vector<16x32xf32>
    %c32 = arith.constant 32 : index
    %170 = memref.load %arg1[%c32] : memref<36xf32, #tpu.memory_space<smem>>
    %171 = vector.extract_strided_slice %144 {offsets = [1, 2], sizes = [16, 32], strides = [1, 1]} : vector<18x34xf32> to vector<16x32xf32>
    %172 = vector.broadcast %170 : f32 to vector<16x32xf32>
    %173 = arith.mulf %172, %171 : vector<16x32xf32>
    %174 = arith.addf %169, %173 : vector<16x32xf32>
    %c33 = arith.constant 33 : index
    %175 = memref.load %arg1[%c33] : memref<36xf32, #tpu.memory_space<smem>>
    %176 = vector.extract_strided_slice %144 {offsets = [2, 0], sizes = [16, 32], strides = [1, 1]} : vector<18x34xf32> to vector<16x32xf32>
    %177 = vector.broadcast %175 : f32 to vector<16x32xf32>
    %178 = arith.mulf %177, %176 : vector<16x32xf32>
    %179 = arith.addf %174, %178 : vector<16x32xf32>
    %c34 = arith.constant 34 : index
    %180 = memref.load %arg1[%c34] : memref<36xf32, #tpu.memory_space<smem>>
    %181 = vector.extract_strided_slice %144 {offsets = [2, 1], sizes = [16, 32], strides = [1, 1]} : vector<18x34xf32> to vector<16x32xf32>
    %182 = vector.broadcast %180 : f32 to vector<16x32xf32>
    %183 = arith.mulf %182, %181 : vector<16x32xf32>
    %184 = arith.addf %179, %183 : vector<16x32xf32>
    %c35 = arith.constant 35 : index
    %185 = memref.load %arg1[%c35] : memref<36xf32, #tpu.memory_space<smem>>
    %186 = vector.extract_strided_slice %144 {offsets = [2, 2], sizes = [16, 32], strides = [1, 1]} : vector<18x34xf32> to vector<16x32xf32>
    %187 = vector.broadcast %185 : f32 to vector<16x32xf32>
    %188 = arith.mulf %187, %186 : vector<16x32xf32>
    %189 = arith.addf %184, %188 : vector<16x32xf32>
    %c0_13 = arith.constant 0 : index
    %c0_14 = arith.constant 0 : index
    %190 = vector.load %arg3[%c0_13, %c0_14] : memref<1x32xf32, #tpu.memory_space<vmem>>, vector<1x32xf32>
    %c0_15 = arith.constant 0 : index
    %c0_16 = arith.constant 0 : index
    %191 = vector.load %arg4[%c0_15, %c0_16] : memref<1x32xf32, #tpu.memory_space<vmem>>, vector<1x32xf32>
    %192 = vector.broadcast %190 : vector<1x32xf32> to vector<16x32xf32>
    %193 = arith.mulf %189, %192 : vector<16x32xf32>
    %cst = arith.constant dense<0.000000e+00> : vector<16xf32>
    %194 = vector.multi_reduction <add>, %193, %cst [1] : vector<16x32xf32> to vector<16xf32>
    %195 = vector.shape_cast %194 : vector<16xf32> to vector<16x1xf32>
    %cst_17 = arith.constant dense<0.000000e+00> : vector<1x16xf32>
    %196 = tpu.matmul %191, %189, %cst_17 {dimension_numbers = #tpu.dot_dimension_numbers<[1], [1], [0], [0], [0, 0, 1, 0], [], []>} : vector<1x32xf32>, vector<16x32xf32>, vector<1x16xf32> -> vector<1x16xf32>
    %197 = vector.broadcast %195 : vector<16x1xf32> to vector<16x16xf32>
    %198 = vector.broadcast %196 : vector<1x16xf32> to vector<16x16xf32>
    %199 = arith.addf %197, %198 : vector<16x16xf32>
    %cst_18 = arith.constant 0.000000e+00 : f32
    %200 = vector.broadcast %cst_18 : f32 to vector<16x16xf32>
    %201 = arith.cmpf ogt, %199, %200 : vector<16x16xf32>
    %cst_19 = arith.constant 0.000000e+00 : f32
    %202 = vector.broadcast %cst_19 : f32 to vector<16x16xf32>
    %203 = arith.minimumf %199, %202 : vector<16x16xf32>
    %204 = math.exp %203 : vector<16x16xf32>
    %cst_20 = arith.constant 1.000000e+00 : f32
    %205 = vector.broadcast %cst_20 : f32 to vector<16x16xf32>
    %206 = arith.subf %204, %205 : vector<16x16xf32>
    %207 = arith.select %201, %199, %206 : vector<16x16xi1>, vector<16x16xf32>
    %c0_21 = arith.constant 0 : index
    %c0_22 = arith.constant 0 : index
    %208 = vector.load %arg5[%c0_21, %c0_22] : memref<16x16xf32, #tpu.memory_space<vmem>>, vector<16x16xf32>
    %cst_23 = arith.constant 0.000000e+00 : f32
    %209 = vector.broadcast %cst_23 : f32 to vector<16x16xf32>
    %210 = arith.cmpf ogt, %208, %209 : vector<16x16xf32>
    %cst_24 = arith.constant -9.000000e+15 : f32
    %211 = vector.broadcast %cst_24 : f32 to vector<16x16xf32>
    %212 = arith.select %210, %207, %211 : vector<16x16xi1>, vector<16x16xf32>
    %cst_25 = arith.constant dense<0xFF800000> : vector<16xf32>
    %213 = vector.multi_reduction <maximumf>, %212, %cst_25 [1] : vector<16x16xf32> to vector<16xf32>
    %214 = vector.shape_cast %213 : vector<16xf32> to vector<16x1xf32>
    %215 = vector.broadcast %214 : vector<16x1xf32> to vector<16x16xf32>
    %216 = arith.subf %212, %215 : vector<16x16xf32>
    %217 = math.exp %216 : vector<16x16xf32>
    %cst_26 = arith.constant dense<0.000000e+00> : vector<16xf32>
    %218 = vector.multi_reduction <add>, %217, %cst_26 [1] : vector<16x16xf32> to vector<16xf32>
    %219 = vector.shape_cast %218 : vector<16xf32> to vector<16x1xf32>
    %220 = tpu.reciprocal %219 {approx = true} : vector<16x1xf32> -> vector<16x1xf32>
    %221 = arith.mulf %219, %220 : vector<16x1xf32>
    %cst_27 = arith.constant 2.000000e+00 : f32
    %222 = vector.broadcast %cst_27 : f32 to vector<16x1xf32>
    %223 = arith.subf %222, %221 : vector<16x1xf32>
    %224 = arith.mulf %220, %223 : vector<16x1xf32>
    %225 = vector.broadcast %224 : vector<16x1xf32> to vector<16x16xf32>
    %226 = arith.mulf %217, %225 : vector<16x16xf32>
    %cst_28 = arith.constant dense<0.000000e+00> : vector<16x32xf32>
    %227 = tpu.matmul %226, %189, %cst_28 {dimension_numbers = #tpu.dot_dimension_numbers<[1], [0], [0], [1], [0, 0, 1, 1], [], []>} : vector<16x16xf32>, vector<16x32xf32>, vector<16x32xf32> -> vector<16x32xf32>
    %cst_29 = arith.constant 0.000000e+00 : f32
    %228 = vector.broadcast %cst_29 : f32 to vector<16x32xf32>
    %229 = arith.cmpf ogt, %227, %228 : vector<16x32xf32>
    %cst_30 = arith.constant 0.000000e+00 : f32
    %230 = vector.broadcast %cst_30 : f32 to vector<16x32xf32>
    %231 = arith.minimumf %227, %230 : vector<16x32xf32>
    %232 = math.exp %231 : vector<16x32xf32>
    %cst_31 = arith.constant 1.000000e+00 : f32
    %233 = vector.broadcast %cst_31 : f32 to vector<16x32xf32>
    %234 = arith.subf %232, %233 : vector<16x32xf32>
    %235 = arith.select %229, %227, %234 : vector<16x32xi1>, vector<16x32xf32>
    %236 = arith.mulf %235, %235 : vector<16x32xf32>
    %cst_32 = arith.constant dense<0.000000e+00> : vector<16xf32>
    %237 = vector.multi_reduction <add>, %236, %cst_32 [1] : vector<16x32xf32> to vector<16xf32>
    %238 = vector.shape_cast %237 : vector<16xf32> to vector<16x1xf32>
    %cst_33 = arith.constant 1.000000e-24 : f32
    %239 = vector.broadcast %cst_33 : f32 to vector<16x1xf32>
    %240 = arith.maximumf %238, %239 : vector<16x1xf32>
    %241 = math.rsqrt %240 : vector<16x1xf32>
    %cst_34 = arith.constant 5.000000e-01 : f32
    %242 = vector.broadcast %cst_34 : f32 to vector<16x1xf32>
    %243 = arith.mulf %242, %240 : vector<16x1xf32>
    %244 = arith.mulf %243, %241 : vector<16x1xf32>
    %245 = arith.mulf %244, %241 : vector<16x1xf32>
    %cst_35 = arith.constant 1.500000e+00 : f32
    %246 = vector.broadcast %cst_35 : f32 to vector<16x1xf32>
    %247 = arith.subf %246, %245 : vector<16x1xf32>
    %248 = arith.mulf %241, %247 : vector<16x1xf32>
    %249 = vector.broadcast %248 : vector<16x1xf32> to vector<16x32xf32>
    %250 = arith.mulf %235, %249 : vector<16x32xf32>
    %c0_36 = arith.constant 0 : index
    %c0_37 = arith.constant 0 : index
    %251 = vector.load %arg6[%c0_36, %c0_37] : memref<1x32xf32, #tpu.memory_space<vmem>>, vector<1x32xf32>
    %252 = vector.broadcast %251 : vector<1x32xf32> to vector<16x32xf32>
    %253 = arith.addf %250, %252 : vector<16x32xf32>
    %c0_38 = arith.constant 0 : index
    %c0_39 = arith.constant 0 : index
    %254 = vector.load %arg7[%c0_38, %c0_39] : memref<16x32xf32, #tpu.memory_space<vmem>>, vector<16x32xf32>
    tpu.vector_store %arg7[%c0_38, %c0_39], %253 {strides = array<i32>} : memref<16x32xf32, #tpu.memory_space<vmem>>, vector<16x32xf32>,
    return
  }
}

</mosaic_0001>

<llo_original>
// kernel: tpu_custom_call.1
$region0: #{tpu_custom_call.1}
  #allocation0 [shape = 'u32[]', space=smem, size = 0x4, offset = 0x4, fixed_abs, tag = 'smem constant byte address 0x4 - core index']
  #allocation1 [shape = 'u32[144,128]{1,0:T(1,128)}', space=vmem, size = 0x12000, scoped, tag = 'internal scratch']
  #allocation2 [shape = 'f32[1]{0:T(128)S(6)}', space=smem, size = 0x200, scoped, tag = 'scoped memory for tpu_custom_call.1']
  %s0 = inlined_call_operand.vmem [shape: f32[4,18,34], index: 0, kind: input, shape index: {}]
  %s1 = inlined_call_operand.vmem [shape: f32[36], index: 1, kind: input, shape index: {}]
  %s2 = inlined_call_operand.<no memory space> [shape: f32[1], index: 2, kind: input, shape index: {}]
  %s3 = inlined_call_operand.vmem [shape: f32[1,32], index: 3, kind: input, shape index: {}]
  %s4 = inlined_call_operand.vmem [shape: f32[1,32], index: 4, kind: input, shape index: {}]
  %s5 = inlined_call_operand.vmem [shape: f32[16,16], index: 5, kind: input, shape index: {}]
  %s6 = inlined_call_operand.vmem [shape: f32[1,32], index: 6, kind: input, shape index: {}]
  %s7 = inlined_call_operand.hbm [shape: f32[16,32], index: 7, kind: output, shape index: {}]
  %s8 = sld [smem:[#allocation0]]
  $region42: #{tpu_custom_call.1} parent=0
    _
  %s10 = ssub.s32 1, %s8
  %s11 = scalar_select 0, %s10, %s8
  %12 = sst [smem:[#allocation2]] %s2
  $region1: #{tpu_custom_call.1} parent=0
    #allocation3 [shape = 'u8[512]{0}', space=smem, size = 0x200, scoped, tag = 'input window, operand 1, single buffered']
    #allocation4 [shape = 's32[1]{0}', space=sflag, size = 0x4, scoped, tag = 'scoped memory for tpu_custom_call.1']
    #allocation5 [shape = 's32[1]{0}', space=sflag, size = 0x4, scoped, tag = 'scoped memory for tpu_custom_call.1']
    #allocation6 [shape = 'u8[8192]{0}', space=vmem, size = 0x2000, scoped, tag = 'output window, operand 0, single buffered']
    %13 = vsyncpa [#allocation5], 0
    %14 = vsyncpa [#allocation4], 0
    // Predicated region
    $region2: #{tpu_custom_call.1} parent=1 // pred_check
      _
    $region3: #{tpu_custom_call.1} parent=1 // pred_check_branch
      %16 = sbr.rel (0) target = $region5
    $region4: #{tpu_custom_call.1} parent=1 // pred_region
      _
    $region5: #{tpu_custom_call.1} parent=1 // pred_fallthru
      _
    // Predicated region
    $region6: #{tpu_custom_call.1} parent=1 // pred_check
      _
    $region7: #{tpu_custom_call.1} parent=1 // pred_check_branch
      %18 = sbr.rel (0) target = $region9
    $region8: #{tpu_custom_call.1} parent=1 // pred_region
      %s20 = ssub.s32 16, 16
      %21 = vsyncadd [#allocation5], %s20
      %s23 = sshll.u32 %s1, 4
      %s24 = int_to_ptr.vmem [resolvable:$true] %s23
      %26 = dma.vmem_to_smem %s24, 16, [#allocation3], [#allocation5]
    $region9: #{tpu_custom_call.1} parent=1 // pred_fallthru
      _
    // Predicated region
    $region10: #{tpu_custom_call.1} parent=1 // pred_check
      _
    $region11: #{tpu_custom_call.1} parent=1 // pred_check_branch
      %28 = sbr.rel (0) target = $region13
    $region12: #{tpu_custom_call.1} parent=1 // pred_region
      _
    $region13: #{tpu_custom_call.1} parent=1 // pred_fallthru
      _
    // Predicated region
    $region14: #{tpu_custom_call.1} parent=1 // pred_check
      _
    $region15: #{tpu_custom_call.1} parent=1 // pred_check_branch
      %30 = sbr.rel (0) target = $region17
    $region16: #{tpu_custom_call.1} parent=1 // pred_region
      _
    $region17: #{tpu_custom_call.1} parent=1 // pred_fallthru
      _
    // Predicated region
    $region18: #{tpu_custom_call.1} parent=1 // pred_check
      _
    $region19: #{tpu_custom_call.1} parent=1 // pred_check_branch
      %32 = sbr.rel (0) target = $region21
    $region20: #{tpu_custom_call.1} parent=1 // pred_region
      _
    $region21: #{tpu_custom_call.1} parent=1 // pred_fallthru
      _
    // Predicated region
    $region22: #{tpu_custom_call.1} parent=1 // pred_check
      _
    $region23: #{tpu_custom_call.1} parent=1 // pred_check_branch
      %34 = sbr.rel (0) target = $region25
    $region24: #{tpu_custom_call.1} parent=1 // pred_region
      _
    $region25: #{tpu_custom_call.1} parent=1 // pred_fallthru
      _
    // Predicated region
    $region26: #{tpu_custom_call.1} parent=1 // pred_check
      _
    $region27: #{tpu_custom_call.1} parent=1 // pred_check_branch
      %36 = sbr.rel (0) target = $region29
    $region28: #{tpu_custom_call.1} parent=1 // pred_region
      _
    $region29: #{tpu_custom_call.1} parent=1 // pred_fallthru
      _
    // Predicated region
    $region30: #{tpu_custom_call.1} parent=1 // pred_check
      _
    $region31: #{tpu_custom_call.1} parent=1 // pred_check_branch
      %38 = sbr.rel (0) target = $region33
    $region32: #{tpu_custom_call.1} parent=1 // pred_region
      %39 = dma.done [#allocation5], 16
    $region33: #{tpu_custom_call.1} parent=1 // pred_fallthru
      _
    %40 = sfence
    %s41 = sld [smem:[#allocation2]]
    %v42 = vstv %s41
    %v43 = vld [vmem:[%s0] sm:$0xff]
    %v44 = vld [vmem:[%s0 + $0x8] sm:$0xff]
    %v45 = vld [vmem:[%s0 + $0x10] sm:$0x3]
    %s46 = sld [smem:[#allocation3]]
    %v47 = vstv %s46
    %v48 = vmul.f32 %v47, %v43
    %v49 = vmul.f32 %v47, %v44
    %v50 = vadd.f32 %v42, %v48
    %v51 = vadd.f32 %v42, %v49
    %s52 = sld [smem:[#allocation3 + $0x1]]
    %v53 = vstv %s52
    %v54 = vmul.f32 %v53, %v43
    %v55 = vmul.f32 %v53, %v44
    %58 = vrot.lane.b32.xlu0 %v54, 127
    %v59 = vpop.permute.xlu0 %58
    %60 = vrot.lane.b32.xlu0 %v55, 127
    %v61 = vpop.permute.xlu0 %60
    %v64 = vadd.f32 %v50, %v59
    %v65 = vadd.f32 %v51, %v61
    %s66 = sld [smem:[#allocation3 + $0x2]]
    %v67 = vstv %s66
    %v68 = vmul.f32 %v67, %v43
    %v69 = vmul.f32 %v67, %v44
    %72 = vrot.lane.b32.xlu0 %v68, 126
    %v73 = vpop.permute.xlu0 %72
    %74 = vrot.lane.b32.xlu0 %v69, 126
    %v75 = vpop.permute.xlu0 %74
    %v78 = vadd.f32 %v64, %v73
    %v79 = vadd.f32 %v65, %v75
    %s80 = sld [smem:[#allocation3 + $0x3]]
    %v81 = vstv %s80
    %v82 = vmul.f32 %v81, %v43
    %v83 = vmul.f32 %v81, %v44
    %v84 = vmul.f32 %v81, %v45
    %vm88 = vcmask 1046528
    %v89 = vrot.slane %v82, 1
    %v90 = vrot.slane %v83, 1
    %v91 = vsel %vm88, %v89, %v90
    %v92 = vrot.slane %v84, 1
    %v93 = vsel %vm88, %v90, %v92
    %v96 = vadd.f32 %v78, %v91
    %v97 = vadd.f32 %v79, %v93
    %s98 = sld [smem:[#allocation3 + $0x4]]
    %v99 = vstv %s98
    %v100 = vmul.f32 %v99, %v43
    %v101 = vmul.f32 %v99, %v44
    %v102 = vmul.f32 %v99, %v45
    %v106 = vrot.slane %v100, 1
    %v107 = vrot.slane %v101, 1
    %v108 = vsel %vm88, %v106, %v107
    %v109 = vrot.slane %v102, 1
    %v110 = vsel %vm88, %v107, %v109
    %111 = vrot.lane.b32.xlu0 %v108, 127
    %v112 = vpop.permute.xlu0 %111
    %113 = vrot.lane.b32.xlu0 %v110, 127
    %v114 = vpop.permute.xlu0 %113
    %v117 = vadd.f32 %v96, %v112
    %v118 = vadd.f32 %v97, %v114
    %s119 = sld [smem:[#allocation3 + $0x5]]
    %v120 = vstv %s119
    %v121 = vmul.f32 %v120, %v43
    %v122 = vmul.f32 %v120, %v44
    %v123 = vmul.f32 %v120, %v45
    %v127 = vrot.slane %v121, 1
    %v128 = vrot.slane %v122, 1
    %v129 = vsel %vm88, %v127, %v128
    %v130 = vrot.slane %v123, 1
    %v131 = vsel %vm88, %v128, %v130
    %132 = vrot.lane.b32.xlu0 %v129, 126
    %v133 = vpop.permute.xlu0 %132
    %134 = vrot.lane.b32.xlu0 %v131, 126
    %v135 = vpop.permute.xlu0 %134
    %v138 = vadd.f32 %v117, %v133
    %v139 = vadd.f32 %v118, %v135
    %s140 = sld [smem:[#allocation3 + $0x6]]
    %v141 = vstv %s140
    %v142 = vmul.f32 %v141, %v43
    %v143 = vmul.f32 %v141, %v44
    %v144 = vmul.f32 %v141, %v45
    %vm148 = vcmask 1045504
    %v149 = vrot.slane %v142, 2
    %v150 = vrot.slane %v143, 2
    %v151 = vsel %vm148, %v149, %v150
    %v152 = vrot.slane %v144, 2
    %v153 = vsel %vm148, %v150, %v152
    %v156 = vadd.f32 %v138, %v151
    %v157 = vadd.f32 %v139, %v153
    %s158 = sld [smem:[#allocation3 + $0x7]]
    %v159 = vstv %s158
    %v160 = vmul.f32 %v159, %v43
    %v161 = vmul.f32 %v159, %v44
    %v162 = vmul.f32 %v159, %v45
    %v166 = vrot.slane %v160, 2
    %v167 = vrot.slane %v161, 2
    %v168 = vsel %vm148, %v166, %v167
    %v169 = vrot.slane %v162, 2
    %v170 = vsel %vm148, %v167, %v169
    %171 = vrot.lane.b32.xlu0 %v168, 127
    %v172 = vpop.permute.xlu0 %171
    %173 = vrot.lane.b32.xlu0 %v170, 127
    %v174 = vpop.permute.xlu0 %173
    %v177 = vadd.f32 %v156, %v172
    %v178 = vadd.f32 %v157, %v174
    %s179 = sld [smem:[#allocation3 + $0x8]]
    %v180 = vstv %s179
    %v181 = vmul.f32 %v180, %v43
    %v182 = vmul.f32 %v180, %v44
    %v183 = vmul.f32 %v180, %v45
    %v187 = vrot.slane %v181, 2
    %v188 = vrot.slane %v182, 2
    %v189 = vsel %vm148, %v187, %v188
    %v190 = vrot.slane %v183, 2
    %v191 = vsel %vm148, %v188, %v190
    %192 = vrot.lane.b32.xlu0 %v189, 126
    %v193 = vpop.permute.xlu0 %192
    %194 = vrot.lane.b32.xlu0 %v191, 126
    %v195 = vpop.permute.xlu0 %194
    %v198 = vadd.f32 %v177, %v193
    %v199 = vadd.f32 %v178, %v195
    %s200 = scalar_lea.vmem %s0, 24
    %v201 = vld [vmem:[%s200] sm:$0xff]
    %v202 = vld [vmem:[%s200 + $0x8] sm:$0xff]
    %v203 = vld [vmem:[%s200 + $0x10] sm:$0x3]
    %s204 = sld [smem:[#allocation3 + $0x9]]
    %v205 = vstv %s204
    %v206 = vmul.f32 %v205, %v201
    %v207 = vmul.f32 %v205, %v202
    %v208 = vadd.f32 %v198, %v206
    %v209 = vadd.f32 %v199, %v207
    %s210 = sld [smem:[#allocation3 + $0xa]]
    %v211 = vstv %s210
    %v212 = vmul.f32 %v211, %v201
    %v213 = vmul.f32 %v211, %v202
    %216 = vrot.lane.b32.xlu0 %v212, 127
    %v217 = vpop.permute.xlu0 %216
    %218 = vrot.lane.b32.xlu0 %v213, 127
    %v219 = vpop.permute.xlu0 %218
    %v222 = vadd.f32 %v208, %v217
    %v223 = vadd.f32 %v209, %v219
    %s224 = sld [smem:[#allocation3 + $0xb]]
    %v225 = vstv %s224
    %v226 = vmul.f32 %v225, %v201
    %v227 = vmul.f32 %v225, %v202
    %230 = vrot.lane.b32.xlu0 %v226, 126
    %v231 = vpop.permute.xlu0 %230
    %232 = vrot.lane.b32.xlu0 %v227, 126
    %v233 = vpop.permute.xlu0 %232
    %v236 = vadd.f32 %v222, %v231
    %v237 = vadd.f32 %v223, %v233
    %s238 = sld [smem:[#allocation3 + $0xc]]
    %v239 = vstv %s238
    %v240 = vmul.f32 %v239, %v201
    %v241 = vmul.f32 %v239, %v202
    %v242 = vmul.f32 %v239, %v203
    %v246 = vrot.slane %v240, 1
    %v247 = vrot.slane %v241, 1
    %v248 = vsel %vm88, %v246, %v247
    %v249 = vrot.slane %v242, 1
    %v250 = vsel %vm88, %v247, %v249
    %v253 = vadd.f32 %v236, %v248
    %v254 = vadd.f32 %v237, %v250
    %s255 = sld [smem:[#allocation3 + $0xd]]
    %v256 = vstv %s255
    %v257 = vmul.f32 %v256, %v201
    %v258 = vmul.f32 %v256, %v202
    %v259 = vmul.f32 %v256, %v203
    %v263 = vrot.slane %v257, 1
    %v264 = vrot.slane %v258, 1
    %v265 = vsel %vm88, %v263, %v264
    %v266 = vrot.slane %v259, 1
    %v267 = vsel %vm88, %v264, %v266
    %268 = vrot.lane.b32.xlu0 %v265, 127
    %v269 = vpop.permute.xlu0 %268
    %270 = vrot.lane.b32.xlu0 %v267, 127
    %v271 = vpop.permute.xlu0 %270
    %v274 = vadd.f32 %v253, %v269
    %v275 = vadd.f32 %v254, %v271
    %s276 = sld [smem:[#allocation3 + $0xe]]
    %v277 = vstv %s276
    %v278 = vmul.f32 %v277, %v201
    %v279 = vmul.f32 %v277, %v202
    %v280 = vmul.f32 %v277, %v203
    %v284 = vrot.slane %v278, 1
    %v285 = vrot.slane %v279, 1
    %v286 = vsel %vm88, %v284, %v285
    %v287 = vrot.slane %v280, 1
    %v288 = vsel %vm88, %v285, %v287
    %289 = vrot.lane.b32.xlu0 %v286, 126
    %v290 = vpop.permute.xlu0 %289
    %291 = vrot.lane.b32.xlu0 %v288, 126
    %v292 = vpop.permute.xlu0 %291
    %v295 = vadd.f32 %v274, %v290
    %v296 = vadd.f32 %v275, %v292
    %s297 = sld [smem:[#allocation3 + $0xf]]
    %v298 = vstv %s297
    %v299 = vmul.f32 %v298, %v201
    %v300 = vmul.f32 %v298, %v202
    %v301 = vmul.f32 %v298, %v203
    %v305 = vrot.slane %v299, 2
    %v306 = vrot.slane %v300, 2
    %v307 = vsel %vm148, %v305, %v306
    %v308 = vrot.slane %v301, 2
    %v309 = vsel %vm148, %v306, %v308
    %v312 = vadd.f32 %v295, %v307
    %v313 = vadd.f32 %v296, %v309
    %s314 = sld [smem:[#allocation3 + $0x10]]
    %v315 = vstv %s314
    %v316 = vmul.f32 %v315, %v201
    %v317 = vmul.f32 %v315, %v202
    %v318 = vmul.f32 %v315, %v203
    %v322 = vrot.slane %v316, 2
    %v323 = vrot.slane %v317, 2
    %v324 = vsel %vm148, %v322, %v323
    %v325 = vrot.slane %v318, 2
    %v326 = vsel %vm148, %v323, %v325
    %327 = vrot.lane.b32.xlu0 %v324, 127
    %v328 = vpop.permute.xlu0 %327
    %329 = vrot.lane.b32.xlu0 %v326, 127
    %v330 = vpop.permute.xlu0 %329
    %v333 = vadd.f32 %v312, %v328
    %v334 = vadd.f32 %v313, %v330
    %s335 = sld [smem:[#allocation3 + $0x11]]
    %v336 = vstv %s335
    %v337 = vmul.f32 %v336, %v201
    %v338 = vmul.f32 %v336, %v202
    %v339 = vmul.f32 %v336, %v203
    %v343 = vrot.slane %v337, 2
    %v344 = vrot.slane %v338, 2
    %v345 = vsel %vm148, %v343, %v344
    %v346 = vrot.slane %v339, 2
    %v347 = vsel %vm148, %v344, %v346
    %348 = vrot.lane.b32.xlu0 %v345, 126
    %v349 = vpop.permute.xlu0 %348
    %350 = vrot.lane.b32.xlu0 %v347, 126
    %v351 = vpop.permute.xlu0 %350
    %v354 = vadd.f32 %v333, %v349
    %v355 = vadd.f32 %v334, %v351
    %s356 = scalar_lea.vmem %s0, 48
    %v357 = vld [vmem:[%s356] sm:$0xff]
    %v358 = vld [vmem:[%s356 + $0x8] sm:$0xff]
    %v359 = vld [vmem:[%s356 + $0x10] sm:$0x3]
    %s360 = sld [smem:[#allocation3 + $0x12]]
    %v361 = vstv %s360
    %v362 = vmul.f32 %v361, %v357
    %v363 = vmul.f32 %v361, %v358
    %v364 = vadd.f32 %v354, %v362
    %v365 = vadd.f32 %v355, %v363
    %s366 = sld [smem:[#allocation3 + $0x13]]
    %v367 = vstv %s366
    %v368 = vmul.f32 %v367, %v357
    %v369 = vmul.f32 %v367, %v358
    %372 = vrot.lane.b32.xlu0 %v368, 127
    %v373 = vpop.permute.xlu0 %372
    %374 = vrot.lane.b32.xlu0 %v369, 127
    %v375 = vpop.permute.xlu0 %374
    %v378 = vadd.f32 %v364, %v373
    %v379 = vadd.f32 %v365, %v375
    %s380 = sld [smem:[#allocation3 + $0x14]]
    %v381 = vstv %s380
    %v382 = vmul.f32 %v381, %v357
    %v383 = vmul.f32 %v381, %v358
    %386 = vrot.lane.b32.xlu0 %v382, 126
    %v387 = vpop.permute.xlu0 %386
    %388 = vrot.lane.b32.xlu0 %v383, 126
    %v389 = vpop.permute.xlu0 %388
    %v392 = vadd.f32 %v378, %v387
    %v393 = vadd.f32 %v379, %v389
    %s394 = sld [smem:[#allocation3 + $0x15]]
    %v395 = vstv %s394
    %v396 = vmul.f32 %v395, %v357
    %v397 = vmul.f32 %v395, %v358
    %v398 = vmul.f32 %v395, %v359
    %v402 = vrot.slane %v396, 1
    %v403 = vrot.slane %v397, 1
    %v404 = vsel %vm88, %v402, %v403
    %v405 = vrot.slane %v398, 1
    %v406 = vsel %vm88, %v403, %v405
    %v409 = vadd.f32 %v392, %v404
    %v410 = vadd.f32 %v393, %v406
    %s411 = sld [smem:[#allocation3 + $0x16]]
    %v412 = vstv %s411
    %v413 = vmul.f32 %v412, %v357
    %v414 = vmul.f32 %v412, %v358
    %v415 = vmul.f32 %v412, %v359
    %v419 = vrot.slane %v413, 1
    %v420 = vrot.slane %v414, 1
    %v421 = vsel %vm88, %v419, %v420
    %v422 = vrot.slane %v415, 1
    %v423 = vsel %vm88, %v420, %v422
    %424 = vrot.lane.b32.xlu0 %v421, 127
    %v425 = vpop.permute.xlu0 %424
    %426 = vrot.lane.b32.xlu0 %v423, 127
    %v427 = vpop.permute.xlu0 %426
    %v430 = vadd.f32 %v409, %v425
    %v431 = vadd.f32 %v410, %v427
    %s432 = sld [smem:[#allocation3 + $0x17]]
    %v433 = vstv %s432
    %v434 = vmul.f32 %v433, %v357
    %v435 = vmul.f32 %v433, %v358
    %v436 = vmul.f32 %v433, %v359
    %v440 = vrot.slane %v434, 1
    %v441 = vrot.slane %v435, 1
    %v442 = vsel %vm88, %v440, %v441
    %v443 = vrot.slane %v436, 1
    %v444 = vsel %vm88, %v441, %v443
    %445 = vrot.lane.b32.xlu0 %v442, 126
    %v446 = vpop.permute.xlu0 %445
    %447 = vrot.lane.b32.xlu0 %v444, 126
    %v448 = vpop.permute.xlu0 %447
    %v451 = vadd.f32 %v430, %v446
    %v452 = vadd.f32 %v431, %v448
    %s453 = sld [smem:[#allocation3 + $0x18]]
    %v454 = vstv %s453
    %v455 = vmul.f32 %v454, %v357
    %v456 = vmul.f32 %v454, %v358
    %v457 = vmul.f32 %v454, %v359
    %v461 = vrot.slane %v455, 2
    %v462 = vrot.slane %v456, 2
    %v463 = vsel %vm148, %v461, %v462
    %v464 = vrot.slane %v457, 2
    %v465 = vsel %vm148, %v462, %v464
    %v468 = vadd.f32 %v451, %v463
    %v469 = vadd.f32 %v452, %v465
    %s470 = sld [smem:[#allocation3 + $0x19]]
    %v471 = vstv %s470
    %v472 = vmul.f32 %v471, %v357
    %v473 = vmul.f32 %v471, %v358
    %v474 = vmul.f32 %v471, %v359
    %v478 = vrot.slane %v472, 2
    %v479 = vrot.slane %v473, 2
    %v480 = vsel %vm148, %v478, %v479
    %v481 = vrot.slane %v474, 2
    %v482 = vsel %vm148, %v479, %v481
    %483 = vrot.lane.b32.xlu0 %v480, 127
    %v484 = vpop.permute.xlu0 %483
    %485 = vrot.lane.b32.xlu0 %v482, 127
    %v486 = vpop.permute.xlu0 %485
    %v489 = vadd.f32 %v468, %v484
    %v490 = vadd.f32 %v469, %v486
    %s491 = sld [smem:[#allocation3 + $0x1a]]
    %v492 = vstv %s491
    %v493 = vmul.f32 %v492, %v357
    %v494 = vmul.f32 %v492, %v358
    %v495 = vmul.f32 %v492, %v359
    %v499 = vrot.slane %v493, 2
    %v500 = vrot.slane %v494, 2
    %v501 = vsel %vm148, %v499, %v500
    %v502 = vrot.slane %v495, 2
    %v503 = vsel %vm148, %v500, %v502
    %504 = vrot.lane.b32.xlu0 %v501, 126
    %v505 = vpop.permute.xlu0 %504
    %506 = vrot.lane.b32.xlu0 %v503, 126
    %v507 = vpop.permute.xlu0 %506
    %v510 = vadd.f32 %v489, %v505
    %v511 = vadd.f32 %v490, %v507
    %s512 = scalar_lea.vmem %s0, 72
    %v513 = vld [vmem:[%s512] sm:$0xff]
    %v514 = vld [vmem:[%s512 + $0x8] sm:$0xff]
    %v515 = vld [vmem:[%s512 + $0x10] sm:$0x3]
    %s516 = sld [smem:[#allocation3 + $0x1b]]
    %v517 = vstv %s516
    %v518 = vmul.f32 %v517, %v513
    %v519 = vmul.f32 %v517, %v514
    %v520 = vadd.f32 %v510, %v518
    %v521 = vadd.f32 %v511, %v519
    %s522 = sld [smem:[#allocation3 + $0x1c]]
    %v523 = vstv %s522
    %v524 = vmul.f32 %v523, %v513
    %v525 = vmul.f32 %v523, %v514
    %528 = vrot.lane.b32.xlu0 %v524, 127
    %v529 = vpop.permute.xlu0 %528
    %530 = vrot.lane.b32.xlu0 %v525, 127
    %v531 = vpop.permute.xlu0 %530
    %v534 = vadd.f32 %v520, %v529
    %v535 = vadd.f32 %v521, %v531
    %s536 = sld [smem:[#allocation3 + $0x1d]]
    %v537 = vstv %s536
    %v538 = vmul.f32 %v537, %v513
    %v539 = vmul.f32 %v537, %v514
    %542 = vrot.lane.b32.xlu0 %v538, 126
    %v543 = vpop.permute.xlu0 %542
    %544 = vrot.lane.b32.xlu0 %v539, 126
    %v545 = vpop.permute.xlu0 %544
    %v548 = vadd.f32 %v534, %v543
    %v549 = vadd.f32 %v535, %v545
    %s550 = sld [smem:[#allocation3 + $0x1e]]
    %v551 = vstv %s550
    %v552 = vmul.f32 %v551, %v513
    %v553 = vmul.f32 %v551, %v514
    %v554 = vmul.f32 %v551, %v515
    %v558 = vrot.slane %v552, 1
    %v559 = vrot.slane %v553, 1
    %v560 = vsel %vm88, %v558, %v559
    %v561 = vrot.slane %v554, 1
    %v562 = vsel %vm88, %v559, %v561
    %v565 = vadd.f32 %v548, %v560
    %v566 = vadd.f32 %v549, %v562
    %s567 = sld [smem:[#allocation3 + $0x1f]]
    %v568 = vstv %s567
    %v569 = vmul.f32 %v568, %v513
    %v570 = vmul.f32 %v568, %v514
    %v571 = vmul.f32 %v568, %v515
    %v575 = vrot.slane %v569, 1
    %v576 = vrot.slane %v570, 1
    %v577 = vsel %vm88, %v575, %v576
    %v578 = vrot.slane %v571, 1
    %v579 = vsel %vm88, %v576, %v578
    %580 = vrot.lane.b32.xlu0 %v577, 127
    %v581 = vpop.permute.xlu0 %580
    %582 = vrot.lane.b32.xlu0 %v579, 127
    %v583 = vpop.permute.xlu0 %582
    %v586 = vadd.f32 %v565, %v581
    %v587 = vadd.f32 %v566, %v583
    %s588 = sld [smem:[#allocation3 + $0x20]]
    %v589 = vstv %s588
    %v590 = vmul.f32 %v589, %v513
    %v591 = vmul.f32 %v589, %v514
    %v592 = vmul.f32 %v589, %v515
    %v596 = vrot.slane %v590, 1
    %v597 = vrot.slane %v591, 1
    %v598 = vsel %vm88, %v596, %v597
    %v599 = vrot.slane %v592, 1
    %v600 = vsel %vm88, %v597, %v599
    %601 = vrot.lane.b32.xlu0 %v598, 126
    %v602 = vpop.permute.xlu0 %601
    %603 = vrot.lane.b32.xlu0 %v600, 126
    %v604 = vpop.permute.xlu0 %603
    %v607 = vadd.f32 %v586, %v602
    %v608 = vadd.f32 %v587, %v604
    %s609 = sld [smem:[#allocation3 + $0x21]]
    %v610 = vstv %s609
    %v611 = vmul.f32 %v610, %v513
    %v612 = vmul.f32 %v610, %v514
    %v613 = vmul.f32 %v610, %v515
    %v617 = vrot.slane %v611, 2
    %v618 = vrot.slane %v612, 2
    %v619 = vsel %vm148, %v617, %v618
    %v620 = vrot.slane %v613, 2
    %v621 = vsel %vm148, %v618, %v620
    %v624 = vadd.f32 %v607, %v619
    %v625 = vadd.f32 %v608, %v621
    %s626 = sld [smem:[#allocation3 + $0x22]]
    %v627 = vstv %s626
    %v628 = vmul.f32 %v627, %v513
    %v629 = vmul.f32 %v627, %v514
    %v630 = vmul.f32 %v627, %v515
    %v634 = vrot.slane %v628, 2
    %v635 = vrot.slane %v629, 2
    %v636 = vsel %vm148, %v634, %v635
    %v637 = vrot.slane %v630, 2
    %v638 = vsel %vm148, %v635, %v637
    %639 = vrot.lane.b32.xlu0 %v636, 127
    %v640 = vpop.permute.xlu0 %639
    %641 = vrot.lane.b32.xlu0 %v638, 127
    %v642 = vpop.permute.xlu0 %641
    %v645 = vadd.f32 %v624, %v640
    %v646 = vadd.f32 %v625, %v642
    %s647 = sld [smem:[#allocation3 + $0x23]]
    %v648 = vstv %s647
    %v649 = vmul.f32 %v648, %v513
    %v650 = vmul.f32 %v648, %v514
    %v651 = vmul.f32 %v648, %v515
    %v655 = vrot.slane %v649, 2
    %v656 = vrot.slane %v650, 2
    %v657 = vsel %vm148, %v655, %v656
    %v658 = vrot.slane %v651, 2
    %v659 = vsel %vm148, %v656, %v658
    %660 = vrot.lane.b32.xlu0 %v657, 126
    %v661 = vpop.permute.xlu0 %660
    %662 = vrot.lane.b32.xlu0 %v659, 126
    %v663 = vpop.permute.xlu0 %662
    %v666 = vadd.f32 %v645, %v661
    %v667 = vadd.f32 %v646, %v663
    %v668 = vld [vmem:[%s3] sm:$0x1]
    %v669 = vld [vmem:[%s4] sm:$0x1]
    %v671 = vlaneseq
    %v672 = vshrl.u32 %v671, 7
    %v673 = vsub.s32 0, %v672
    %v674 = vrot.slane %v668, %v673
    %v676 = vmul.f32 %v666, %v674
    %v677 = vmul.f32 %v667, %v674
    %vm678 = vcmask 261120
    %v679 = vsel %vm678, %v676, 0.0
    %680 = vadd.xlane.f32.xlu0 %v679
    %v681 = vpop.xlane.xlu0 %680
    %v682 = vsel %vm678, %v677, 0.0
    %683 = vadd.xlane.f32.xlu0 %v682
    %v684 = vpop.xlane.xlu0 %683
    %v686 = vsel %vm678, %v669, 0
    %v689 = vsel %vm678, %v666, 0
    %v692 = vsel %vm678, %v667, 0
    %694 = vmatprep.subr.mxu0 0.0
    %695 = vmatpush1.xpose.msra.mxu0 0.0
    %696 = vmatprep.subr.mxu0 0.0
    %697 = vmatpush1.xpose.msra.mxu0 0.0
    %698 = vmatprep.subr.mxu0 0.0
    %699 = vmatpush1.xpose.msra.mxu0 0.0
    %700 = vmatprep.subr.mxu0 0.0
    %701 = vmatpush1.xpose.msra.mxu0 0.0
    %702 = vmatprep.subr.mxu0 0.0
    %703 = vmatpush1.xpose.msra.mxu0 0.0
    %704 = vmatprep.subr.mxu0 0.0
    %705 = vmatpush1.xpose.msra.mxu0 0.0
    %706 = vmatprep.subr.mxu0 0.0
    %707 = vmatpush1.xpose.msra.mxu0 0.0
    %708 = vmatprep.subr.mxu0 0.0
    %709 = vmatpush1.xpose.msra.mxu0 0.0
    %710 = vmatprep.subr.mxu0 0.0
    %711 = vmatpush1.xpose.msra.mxu0 0.0
    %712 = vmatprep.subr.mxu0 0.0
    %713 = vmatpush1.xpose.msra.mxu0 0.0
    %714 = vmatprep.subr.mxu0 0.0
    %715 = vmatpush1.xpose.msra.mxu0 0.0
    %716 = vmatprep.subr.mxu0 0.0
    %717 = vmatpush1.xpose.msra.mxu0 0.0
    %718 = vmatprep.subr.mxu0 0.0
    %719 = vmatpush1.xpose.msra.mxu0 0.0
    %720 = vmatprep.subr.mxu0 0.0
    %721 = vmatpush1.xpose.msra.mxu0 0.0
    %722 = vmatprep.subr.mxu0 0.0
    %723 = vmatpush1.xpose.msra.mxu0 %v692
    %724 = vmatprep.subr.mxu0 0.0
    %725 = vmatpush1.xpose.msra.mxu0 %v689
    %726 = vmatprep.subr.mxu0 0.0
    %727 = vmatpush2.xpose.msra.mxu0 0.0
    %728 = vmatprep.subr.mxu0 0.0
    %729 = vmatpush2.xpose.msra.mxu0 0.0
    %730 = vmatprep.subr.mxu0 0.0
    %731 = vmatpush2.xpose.msra.mxu0 0.0
    %732 = vmatprep.subr.mxu0 0.0
    %733 = vmatpush2.xpose.msra.mxu0 0.0
    %734 = vmatprep.subr.mxu0 0.0
    %735 = vmatpush2.xpose.msra.mxu0 0.0
    %736 = vmatprep.subr.mxu0 0.0
    %737 = vmatpush2.xpose.msra.mxu0 0.0
    %738 = vmatprep.subr.mxu0 0.0
    %739 = vmatpush2.xpose.msra.mxu0 0.0
    %740 = vmatprep.subr.mxu0 0.0
    %741 = vmatpush2.xpose.msra.mxu0 0.0
    %742 = vmatprep.subr.mxu0 0.0
    %743 = vmatpush2.xpose.msra.mxu0 0.0
    %744 = vmatprep.subr.mxu0 0.0
    %745 = vmatpush2.xpose.msra.mxu0 0.0
    %746 = vmatprep.subr.mxu0 0.0
    %747 = vmatpush2.xpose.msra.mxu0 0.0
    %748 = vmatprep.subr.mxu0 0.0
    %749 = vmatpush2.xpose.msra.mxu0 0.0
    %750 = vmatprep.subr.mxu0 0.0
    %751 = vmatpush2.xpose.msra.mxu0 0.0
    %752 = vmatprep.subr.mxu0 0.0
    %753 = vmatpush2.xpose.msra.mxu0 0.0
    %754 = vmatprep.subr.mxu0 0.0
    %755 = vmatpush2.xpose.msra.mxu0 0.0
    %756 = vmatprep.subr.mxu0 0.0
    %757 = vmatpush2.xpose.msra.mxu0 0.0
    %758 = vmatprep.mubr.f32.mxu0 0.0
    %759 = vmatmul.mubr.f32.gmra.mxu0 %v686
    %v760 = vpop.f32.mrf.mxu0
    %v761 = vadd.f32 0.0, %v760
    %v762 = vpop.f32.mrf.mxu0
    %763 = vdwg.mxu0
    %v764 = vlaneseq
    %v765 = vshrl.u32 %v764, 7
    %v766 = vsub.s32 0, %v765
    %v767 = vrot.slane %v761, %v766
    %v768 = vadd.f32 %v681, %v767
    %v769 = vadd.f32 %v684, %v767
    %vm770 = vcmp.gt.f32.partialorder %v768, 0.0
    %vm771 = vcmp.gt.f32.partialorder %v769, 0.0
    %v772 = vmin.f32 %v768, 0.0
    %v773 = vmin.f32 %v769, 0.0
    %v774 = vmul.f32 %v772, 1.442695
    %v775 = vpow.pop %v774
    %v776 = vmul.f32 %v773, 1.442695
    %v777 = vpow.pop %v776
    %v778 = vsub.f32 %v775, 1.0
    %v779 = vsub.f32 %v777, 1.0
    %v780 = vsel %vm770, %v768, %v778
    %v781 = vsel %vm771, %v769, %v779
    %v782 = vld [vmem:[%s5] sm:$0xff]
    %v783 = vld [vmem:[%s5 + $0x8] sm:$0xff]
    %vm784 = vcmp.gt.f32.partialorder %v782, 0.0
    %vm785 = vcmp.gt.f32.partialorder %v783, 0.0
    %v786 = vsel %vm784, %v780, -9e+15
    %v787 = vsel %vm785, %v781, -9e+15
    %vm788 = vcmask 130048
    %v789 = vsel %vm788, %v786, -inf
    %790 = vmax.xlane.f32.xlu0 %v789
    %v791 = vpop.xlane.xlu0 %790
    %v792 = vsel %vm788, %v787, -inf
    %793 = vmax.xlane.f32.xlu0 %v792
    %v794 = vpop.xlane.xlu0 %793
    %v795 = vsub.f32 %v786, %v791
    %v796 = vsub.f32 %v787, %v794
    %v797 = vmul.f32 %v795, 1.442695
    %v798 = vpow.pop %v797
    %v799 = vmul.f32 %v796, 1.442695
    %v800 = vpow.pop %v799
    %v801 = vsel %vm788, %v798, 0.0
    %802 = vadd.xlane.f32.xlu0 %v801
    %v803 = vpop.xlane.xlu0 %802
    %v804 = vsel %vm788, %v800, 0.0
    %805 = vadd.xlane.f32.xlu0 %v804
    %v806 = vpop.xlane.xlu0 %805
    %v807 = vrcp.pop %v803
    %v808 = vrcp.pop %v806
    %v809 = vmul.f32 %v803, %v807
    %v810 = vmul.f32 %v806, %v808
    %v811 = vsub.f32 2.0, %v809
    %v812 = vsub.f32 2.0, %v810
    %v813 = vmul.f32 %v807, %v811
    %v814 = vmul.f32 %v808, %v812
    %v815 = vmul.f32 %v798, %v813
    %v816 = vmul.f32 %v800, %v814
    %v818 = vsel %vm788, %v815, 0
    %v821 = vsel %vm788, %v816, 0
    %823 = vmatprep.subr.mxu0 0.0
    %824 = vmatpush1.msra.mxu0 0.0
    %825 = vmatprep.subr.mxu0 0.0
    %826 = vmatpush1.msra.mxu0 0.0
    %827 = vmatprep.subr.mxu0 0.0
    %828 = vmatpush1.msra.mxu0 0.0
    %829 = vmatprep.subr.mxu0 0.0
    %830 = vmatpush1.msra.mxu0 0.0
    %831 = vmatprep.subr.mxu0 0.0
    %832 = vmatpush1.msra.mxu0 0.0
    %833 = vmatprep.subr.mxu0 0.0
    %834 = vmatpush1.msra.mxu0 0.0
    %835 = vmatprep.subr.mxu0 0.0
    %836 = vmatpush1.msra.mxu0 0.0
    %837 = vmatprep.subr.mxu0 0.0
    %838 = vmatpush1.msra.mxu0 0.0
    %839 = vmatprep.subr.mxu0 0.0
    %840 = vmatpush1.msra.mxu0 0.0
    %841 = vmatprep.subr.mxu0 0.0
    %842 = vmatpush1.msra.mxu0 0.0
    %843 = vmatprep.subr.mxu0 0.0
    %844 = vmatpush1.msra.mxu0 0.0
    %845 = vmatprep.subr.mxu0 0.0
    %846 = vmatpush1.msra.mxu0 0.0
    %847 = vmatprep.subr.mxu0 0.0
    %848 = vmatpush1.msra.mxu0 0.0
    %849 = vmatprep.subr.mxu0 0.0
    %850 = vmatpush1.msra.mxu0 0.0
    %851 = vmatprep.subr.mxu0 0.0
    %852 = vmatpush1.msra.mxu0 %v667
    %853 = vmatprep.subr.mxu0 0.0
    %854 = vmatpush1.msra.mxu0 %v666
    %855 = vmatprep.subr.mxu0 0.0
    %856 = vmatpush2.msra.mxu0 0.0
    %857 = vmatprep.subr.mxu0 0.0
    %858 = vmatpush2.msra.mxu0 0.0
    %859 = vmatprep.subr.mxu0 0.0
    %860 = vmatpush2.msra.mxu0 0.0
    %861 = vmatprep.subr.mxu0 0.0
    %862 = vmatpush2.msra.mxu0 0.0
    %863 = vmatprep.subr.mxu0 0.0
    %864 = vmatpush2.msra.mxu0 0.0
    %865 = vmatprep.subr.mxu0 0.0
    %866 = vmatpush2.msra.mxu0 0.0
    %867 = vmatprep.subr.mxu0 0.0
    %868 = vmatpush2.msra.mxu0 0.0
    %869 = vmatprep.subr.mxu0 0.0
    %870 = vmatpush2.msra.mxu0 0.0
    %871 = vmatprep.subr.mxu0 0.0
    %872 = vmatpush2.msra.mxu0 0.0
    %873 = vmatprep.subr.mxu0 0.0
    %874 = vmatpush2.msra.mxu0 0.0
    %875 = vmatprep.subr.mxu0 0.0
    %876 = vmatpush2.msra.mxu0 0.0
    %877 = vmatprep.subr.mxu0 0.0
    %878 = vmatpush2.msra.mxu0 0.0
    %879 = vmatprep.subr.mxu0 0.0
    %880 = vmatpush2.msra.mxu0 0.0
    %881 = vmatprep.subr.mxu0 0.0
    %882 = vmatpush2.msra.mxu0 0.0
    %883 = vmatprep.subr.mxu0 0.0
    %884 = vmatpush2.msra.mxu0 0.0
    %885 = vmatprep.subr.mxu0 0.0
    %886 = vmatpush2.msra.mxu0 0.0
    %887 = vmatprep.mubr.f32.mxu0 0.0
    %888 = vmatmul.mubr.f32.gmra.mxu0 %v818
    %v889 = vpop.f32.mrf.mxu0
    %v890 = vadd.f32 0.0, %v889
    %v891 = vpop.f32.mrf.mxu0
    %892 = vmatprep.mubr.f32.mxu0 0.0
    %893 = vmatmul.mubr.f32.gmra.mxu0 %v821
    %v894 = vpop.f32.mrf.mxu0
    %v895 = vadd.f32 0.0, %v894
    %v896 = vpop.f32.mrf.mxu0
    %897 = vdwg.mxu0
    %vm898 = vcmp.gt.f32.partialorder %v890, 0.0
    %vm899 = vcmp.gt.f32.partialorder %v895, 0.0
    %v900 = vmin.f32 %v890, 0.0
    %v901 = vmin.f32 %v895, 0.0
    %v902 = vmul.f32 %v900, 1.442695
    %v903 = vpow.pop %v902
    %v904 = vmul.f32 %v901, 1.442695
    %v905 = vpow.pop %v904
    %v906 = vsub.f32 %v903, 1.0
    %v907 = vsub.f32 %v905, 1.0
    %v908 = vsel %vm898, %v890, %v906
    %v909 = vsel %vm899, %v895, %v907
    %v910 = vmul.f32 %v908, %v908
    %v911 = vmul.f32 %v909, %v909
    %v912 = vsel %vm678, %v910, 0.0
    %913 = vadd.xlane.f32.xlu0 %v912
    %v914 = vpop.xlane.xlu0 %913
    %v915 = vsel %vm678, %v911, 0.0
    %916 = vadd.xlane.f32.xlu0 %v915
    %v917 = vpop.xlane.xlu0 %916
    %v918 = vmax.f32 %v914, 1e-24
    %v919 = vmax.f32 %v917, 1e-24
    %v920 = vrsqrt.pop %v918
    %v921 = vrsqrt.pop %v919
    %v922 = vmul.f32 %v918, 0.5
    %v923 = vmul.f32 %v919, 0.5
    %v924 = vmul.f32 %v922, %v920
    %v925 = vmul.f32 %v923, %v921
    %v926 = vmul.f32 %v924, %v920
    %v927 = vmul.f32 %v925, %v921
    %v928 = vsub.f32 1.5, %v926
    %v929 = vsub.f32 1.5, %v927
    %v930 = vmul.f32 %v920, %v928
    %v931 = vmul.f32 %v921, %v929
    %v932 = vmul.f32 %v908, %v930
    %v933 = vmul.f32 %v909, %v931
    %v934 = vld [vmem:[%s6] sm:$0x1]
    %v936 = vlaneseq
    %v937 = vshrl.u32 %v936, 7
    %v938 = vsub.s32 0, %v937
    %v939 = vrot.slane %v934, %v938
    %v941 = vadd.f32 %v932, %v939
    %v942 = vadd.f32 %v933, %v939
    %943 = vst.msk [vmem:[#allocation6] sm:$0xff] %vm678, %v941
    %944 = vst.msk [vmem:[#allocation6 + $0x8] sm:$0xff] %vm678, %v942
    // Predicated region
    $region34: #{tpu_custom_call.1} parent=1 // pred_check
      _
    $region35: #{tpu_custom_call.1} parent=1 // pred_check_branch
      %946 = sbr.rel (0) target = $region37
    $region36: #{tpu_custom_call.1} parent=1 // pred_region
      %s948 = ssub.s32 256, 256
      %949 = vsyncadd [#allocation4], %s948
      %s950 = sshll.u32 [#allocation6], 4
      %s951 = int_to_ptr.vmem [resolvable:$true] %s950
      %956 = dma.vmem_to_hbm [thread:$0]  %s951, 256, %s7, [#allocation4], 128, 128, 8
    $region37: #{tpu_custom_call.1} parent=1 // pred_fallthru
      _
    // Predicated region
    $region38: #{tpu_custom_call.1} parent=1 // pred_check
      _
    $region39: #{tpu_custom_call.1} parent=1 // pred_check_branch
      %958 = sbr.rel (0) target = $region41
    $region40: #{tpu_custom_call.1} parent=1 // pred_region
      %959 = dma.done [#allocation4], 256
    $region41: #{tpu_custom_call.1} parent=1 // pred_fallthru
      _
    %960 = vsyncpa [#allocation4], 1
    %961 = vsyncpa [#allocation5], 1

</llo_original>
